<compile_context>
chip_gen: v7x
topology: tpu7x:2x2x1
jax: 0.10.0
libtpu: 0.0.40
codegen_flags: <defaults>
</compile_context>

<pallas_src>
import jax
import jax.numpy as jnp
from jax.experimental import pallas as pl
from jax.experimental.pallas import tpu as pltpu


def _embeddings_kernel(p_ref, w_ref, pos_ref, o_ref):
    # p_ref:   (Bt, Tp, K)  bf16 patch rows (row 0 of each image = zeros -> CLS)
    # w_ref:   (K, Dp)      bf16 flattened conv weight (D zero-padded to Dp)
    # pos_ref: (Tp, Dp)     f32 fused table: row0 = pos0+cls, rows 1..N = pos+bias
    # o_ref:   (Bt, Tp, Dp) output
    bt, tp, k = p_ref.shape
    dp = w_ref.shape[-1]
    # Leading-dim reshapes are layout-free (Tp is a multiple of 8).
    p = p_ref[...].reshape(bt * tp, k)
    proj = jnp.dot(p, w_ref[...], preferred_element_type=jnp.float32)
    o_ref[...] = (proj.reshape(bt, tp, dp) + pos_ref[...]).astype(o_ref.dtype)
    # TODO(synk): nn.Dropout(hidden_drop_prob=0.0) is identity; non-zero dropout
    # would use pltpu.prng_seed + pltpu.stateful_bernoulli here.


def _round_up(x, m):
    return ((x + m - 1) // m) * m


def embeddings_forward(x, conv_w, conv_b, cls_token, pos_emb, patch_size,
                       compute_dtype=jnp.bfloat16, out_dtype=jnp.float32,
                       return_padded=False, target_rows=1024):
    """CLIP Embeddings forward.

    x: (B, C, H, W) NCHW.  Returns (B, N+1, D) in `out_dtype`, or the padded
    (Bp, Tp, Dp) slab if return_padded=True (skips the un-pad HBM pass; valid
    data lives at [:B, :N+1, :D]).
    """
    B, C, H, W = x.shape
    ph, pw = patch_size
    D = conv_w.shape[0]
    nH, nW = H // ph, W // pw
    N = nH * nW
    K = C * ph * pw
    T = N + 1                         # tokens incl. CLS

    Tp = _round_up(T, 8)              # sublane-dense token dim
    Dp = _round_up(D, 128)            # lane-dense output dim (K stays unpadded)

    # ---- batch tiling: pad B so every grid step sees Bt images (~target_rows
    # matmul rows), and keep >= 2 steps when B >= 2 so both v7x TCs get work.
    target_bt = max(1, target_rows // Tp)
    grid_steps = max(-(-B // target_bt), 2 if B >= 2 else 1)
    Bt = -(-B // grid_steps)
    Bp = Bt * grid_steps

    # ---- im2col glue: (B,C,H,W) -> (Bp, Tp, K) in (c, kh, kw) order, bf16.
    # Under jit, allow_input_fusion lets XLA fuse this producer into the
    # pallas_call input DMA instead of materialising a second HBM copy.
    xc = x.astype(compute_dtype)
    patches = xc.reshape(B, C, nH, ph, nW, pw).transpose(0, 2, 4, 1, 3, 5)
    patches = patches.reshape(B, N, K)
    # Prepend one zero row per image (CLS slot); zero-pad tokens and batch.
    patches = jnp.pad(patches, ((0, Bp - B), (1, Tp - T), (0, 0)))

    # ---- Conv2d weight (D,C,ph,pw) -> (K, Dp), bf16, only D zero-padded.
    w_flat = conv_w.reshape(D, K).T
    w_flat = jnp.pad(w_flat, ((0, 0), (0, Dp - D))).astype(compute_dtype)

    # ---- fold bias + CLS into the position table (f32, single (Tp, Dp) block):
    #   row 0 (CLS slot; its patch row is all zeros): pos0 + cls
    #   rows 1..N:                                    pos_t + bias
    pos_eff = pos_emb[0].astype(jnp.float32)
    pos_eff = pos_eff.at[1:].add(conv_b.astype(jnp.float32))
    pos_eff = pos_eff.at[0].add(cls_token[0, 0].astype(jnp.float32))
    pos_eff = jnp.pad(pos_eff, ((0, Tp - T), (0, Dp - D)))

    # ---- explicit VMEM budget (conservatively assume 2 buffers everywhere).
    cs = jnp.dtype(compute_dtype).itemsize
    osz = jnp.dtype(out_dtype).itemsize
    est = (2 * Bt * Tp * K * cs + 2 * K * Dp * cs
           + 2 * Tp * Dp * 4 + 2 * Bt * Tp * Dp * osz)
    vmem_limit = int(min(max(est * 2 + (1 << 20), 16 << 20), 64 << 20))

    def _call(use_hints):
        const_kw = dict(pipeline_mode=pl.Buffered(1)) if use_hints else {}
        cp_kw = dict(allow_input_fusion=[True, False, False]) if use_hints else {}
        return pl.pallas_call(
            _embeddings_kernel,
            out_shape=jax.ShapeDtypeStruct((Bp, Tp, Dp), out_dtype),
            grid_spec=pltpu.PrefetchScalarGridSpec(
                num_scalar_prefetch=0,
                grid=(grid_steps,),
                in_specs=[
                    pl.BlockSpec((Bt, Tp, K), lambda i: (i, 0, 0)),
                    pl.BlockSpec((K, Dp), lambda i: (0, 0), **const_kw),
                    pl.BlockSpec((Tp, Dp), lambda i: (0, 0), **const_kw),
                ],
                out_specs=pl.BlockSpec((Bt, Tp, Dp), lambda i: (i, 0, 0)),
            ),
            compiler_params=pltpu.CompilerParams(
                dimension_semantics=("parallel",),
                vmem_limit_bytes=vmem_limit,
                **cp_kw),
        )(patches, w_flat, pos_eff)

    try:
        out = _call(True)
    except Exception:
        # The perf hints (single-buffered constants / input fusion) are not
        # load-bearing; fall back to the plain pipeline if this JAX build
        # rejects them.  Kernel body and numerics are identical.
        out = _call(False)

    if return_padded:
        return out                    # (Bp, Tp, Dp); valid data at [:B, :T, :D]
    return out[:B, :T, :D]


if __name__ == "__main__":
    # Small shapes consistent with the module.
    d_model = 32
    img_size = (16, 16)
    patch_size = (4, 4)
    n_channels = 4
    batch = 2
    num_patches = (img_size[0] * img_size[1]) // (patch_size[0] * patch_size[1])  # 16

    key = jax.random.PRNGKey(0)
    k_x, k_w, k_b, k_cls, k_pos = jax.random.split(key, 5)

    x = jax.random.normal(k_x, (batch, n_channels, *img_size), dtype=jnp.float32)
    conv_w = jax.random.normal(
        k_w, (d_model, n_channels, *patch_size), dtype=jnp.float32) * 0.02
    conv_b = jax.random.normal(k_b, (d_model,), dtype=jnp.float32) * 0.02
    cls_token = jax.random.normal(k_cls, (1, 1, d_model), dtype=jnp.float32)
    pos_emb = jax.random.normal(
        k_pos, (1, num_patches + 1, d_model), dtype=jnp.float32)

    out = embeddings_forward(x, conv_w, conv_b, cls_token, pos_emb, patch_size)
    out = jax.block_until_ready(out)
    assert out.shape == (batch, num_patches + 1, d_model), out.shape

    # --- pure-JAX references -------------------------------------------------
    B, C, H, W = x.shape
    ph, pw = patch_size
    nH, nW = H // ph, W // pw

    # (a) matched reference: same bf16-rounded inputs, f32 accumulate (tight).
    xr = x.astype(jnp.bfloat16).astype(jnp.float32)
    wr = conv_w.reshape(d_model, -1).T.astype(jnp.bfloat16).astype(jnp.float32)
    rp = xr.reshape(B, C, nH, ph, nW, pw).transpose(0, 2, 4, 1, 3, 5)
    rp = rp.reshape(B, num_patches, C * ph * pw)
    ref_proj = rp @ wr + conv_b
    ref = jnp.concatenate(
        [jnp.broadcast_to(cls_token, (B, 1, d_model)), ref_proj], axis=1) + pos_emb
    assert jnp.allclose(out, ref, atol=1e-3, rtol=1e-3)

    # (b) full-f32 reference (module semantics), loose tolerance for bf16 inputs.
    rp32 = x.reshape(B, C, nH, ph, nW, pw).transpose(0, 2, 4, 1, 3, 5)
    rp32 = rp32.reshape(B, num_patches, C * ph * pw)
    ref32_proj = rp32 @ conv_w.reshape(d_model, -1).T + conv_b
    ref32 = jnp.concatenate(
        [jnp.broadcast_to(cls_token, (B, 1, d_model)), ref32_proj], axis=1) + pos_emb
    assert jnp.allclose(out, ref32, atol=3e-2, rtol=3e-2)

    print("KERNEL_OK")
</pallas_src>

<mosaic_0001>
module attributes {stable_mosaic.version = 11 : i64} {
  func.func @_embeddings_kernel(%arg0: i32, %arg1: memref<1x24x64xbf16, #tpu.memory_space<vmem>>, %arg2: memref<64x128xbf16, #tpu.memory_space<vmem>>, %arg3: memref<24x128xf32, #tpu.memory_space<vmem>>, %arg4: memref<1x24x128xf32, #tpu.memory_space<vmem>>) attributes {dimension_semantics = [#tpu.dimension_semantics<parallel>], iteration_bounds = array<i64: 2>, scalar_prefetch = 0 : i64, scratch_operands = 0 : i64, tpu.core_type = #tpu.core_type<tc>, window_params = [{transform_indices = @transform_0, window_bounds = array<i64: 1, 24, 64>}, {pipeline_mode = #tpu.pipeline_mode<synchronous>, transform_indices = @transform_1, window_bounds = array<i64: 64, 128>}, {pipeline_mode = #tpu.pipeline_mode<synchronous>, transform_indices = @transform_2, window_bounds = array<i64: 24, 128>}, {transform_indices = @transform_3, window_bounds = array<i64: 1, 24, 128>}]} {
    %c0 = arith.constant 0 : index
    %c0_0 = arith.constant 0 : index
    %c0_1 = arith.constant 0 : index
    %0 = vector.load %arg1[%c0, %c0_0, %c0_1] : memref<1x24x64xbf16, #tpu.memory_space<vmem>>, vector<1x24x64xbf16>
    %1 = vector.shape_cast %0 : vector<1x24x64xbf16> to vector<24x64xbf16>
    %c0_2 = arith.constant 0 : index
    %c0_3 = arith.constant 0 : index
    %2 = vector.load %arg2[%c0_2, %c0_3] : memref<64x128xbf16, #tpu.memory_space<vmem>>, vector<64x128xbf16>
    %cst = arith.constant dense<0.000000e+00> : vector<24x128xf32>
    %3 = tpu.matmul %1, %2, %cst {dimension_numbers = #tpu.dot_dimension_numbers<[1], [0], [0], [1], [0, 0, 1, 1], [], []>} : vector<24x64xbf16>, vector<64x128xbf16>, vector<24x128xf32> -> vector<24x128xf32>
    %4 = vector.shape_cast %3 : vector<24x128xf32> to vector<1x24x128xf32>
    %c0_4 = arith.constant 0 : index
    %c0_5 = arith.constant 0 : index
    %5 = vector.load %arg3[%c0_4, %c0_5] : memref<24x128xf32, #tpu.memory_space<vmem>>, vector<24x128xf32>
    %6 = vector.shape_cast %5 : vector<24x128xf32> to vector<1x24x128xf32>
    %7 = arith.addf %4, %6 : vector<1x24x128xf32>
    %c0_6 = arith.constant 0 : index
    %c0_7 = arith.constant 0 : index
    %c0_8 = arith.constant 0 : index
    %8 = vector.load %arg4[%c0_6, %c0_7, %c0_8] : memref<1x24x128xf32, #tpu.memory_space<vmem>>, vector<1x24x128xf32>
    tpu.vector_store %arg4[%c0_6, %c0_7, %c0_8], %7 {strides = array<i32>} : memref<1x24x128xf32, #tpu.memory_space<vmem>>, vector<1x24x128xf32>,
    return
  }
  func.func @transform_0(%arg0: i32) -> (i32, i32, i32) {
    %c0_i32 = arith.constant 0 : i32
    %c0_i32_0 = arith.constant 0 : i32
    %c0_i32_1 = arith.constant 0 : i32
    return %arg0, %c0_i32, %c0_i32_0 : i32, i32, i32
  }
  func.func @transform_1(%arg0: i32) -> (i32, i32) {
    %c0_i32 = arith.constant 0 : i32
    %c0_i32_0 = arith.constant 0 : i32
    %c0_i32_1 = arith.constant 0 : i32
    return %c0_i32, %c0_i32_0 : i32, i32
  }
  func.func @transform_2(%arg0: i32) -> (i32, i32) {
    %c0_i32 = arith.constant 0 : i32
    %c0_i32_0 = arith.constant 0 : i32
    %c0_i32_1 = arith.constant 0 : i32
    return %c0_i32, %c0_i32_0 : i32, i32
  }
  func.func @transform_3(%arg0: i32) -> (i32, i32, i32) {
    %c0_i32 = arith.constant 0 : i32
    %c0_i32_0 = arith.constant 0 : i32
    %c0_i32_1 = arith.constant 0 : i32
    return %arg0, %c0_i32, %c0_i32_0 : i32, i32, i32
  }
}

module attributes {stable_mosaic.version = 11 : i64} {
  func.func @_embeddings_kernel(%arg0: i32, %arg1: memref<1x24x64xbf16, #tpu.memory_space<vmem>>, %arg2: memref<64x128xbf16, #tpu.memory_space<vmem>>, %arg3: memref<24x128xf32, #tpu.memory_space<vmem>>, %arg4: memref<1x24x128xf32, #tpu.memory_space<vmem>>) attributes {dimension_semantics = [#tpu.dimension_semantics<parallel>], iteration_bounds = array<i64: 2>, scalar_prefetch = 0 : i64, scratch_operands = 0 : i64, tpu.core_type = #tpu.core_type<tc>, window_params = [{transform_indices = @transform_0, window_bounds = array<i64: 1, 24, 64>}, {pipeline_mode = #tpu.pipeline_mode<synchronous>, transform_indices = @transform_1, window_bounds = array<i64: 64, 128>}, {pipeline_mode = #tpu.pipeline_mode<synchronous>, transform_indices = @transform_2, window_bounds = array<i64: 24, 128>}, {transform_indices = @transform_3, window_bounds = array<i64: 1, 24, 128>}]} {
    %c0 = arith.constant 0 : index
    %c0_0 = arith.constant 0 : index
    %c0_1 = arith.constant 0 : index
    %0 = vector.load %arg1[%c0, %c0_0, %c0_1] : memref<1x24x64xbf16, #tpu.memory_space<vmem>>, vector<1x24x64xbf16>
    %1 = vector.shape_cast %0 : vector<1x24x64xbf16> to vector<24x64xbf16>
    %c0_2 = arith.constant 0 : index
    %c0_3 = arith.constant 0 : index
    %2 = vector.load %arg2[%c0_2, %c0_3] : memref<64x128xbf16, #tpu.memory_space<vmem>>, vector<64x128xbf16>
    %cst = arith.constant dense<0.000000e+00> : vector<24x128xf32>
    %3 = tpu.matmul %1, %2, %cst {dimension_numbers = #tpu.dot_dimension_numbers<[1], [0], [0], [1], [0, 0, 1, 1], [], []>} : vector<24x64xbf16>, vector<64x128xbf16>, vector<24x128xf32> -> vector<24x128xf32>
    %4 = vector.shape_cast %3 : vector<24x128xf32> to vector<1x24x128xf32>
    %c0_4 = arith.constant 0 : index
    %c0_5 = arith.constant 0 : index
    %5 = vector.load %arg3[%c0_4, %c0_5] : memref<24x128xf32, #tpu.memory_space<vmem>>, vector<24x128xf32>
    %6 = vector.shape_cast %5 : vector<24x128xf32> to vector<1x24x128xf32>
    %7 = arith.addf %4, %6 : vector<1x24x128xf32>
    %c0_6 = arith.constant 0 : index
    %c0_7 = arith.constant 0 : index
    %c0_8 = arith.constant 0 : index
    %8 = vector.load %arg4[%c0_6, %c0_7, %c0_8] : memref<1x24x128xf32, #tpu.memory_space<vmem>>, vector<1x24x128xf32>
    tpu.vector_store %arg4[%c0_6, %c0_7, %c0_8], %7 {strides = array<i32>} : memref<1x24x128xf32, #tpu.memory_space<vmem>>, vector<1x24x128xf32>,
    return
  }
  func.func @transform_0(%arg0: i32) -> (i32, i32, i32) {
    %c0_i32 = arith.constant 0 : i32
    %c0_i32_0 = arith.constant 0 : i32
    %c0_i32_1 = arith.constant 0 : i32
    return %arg0, %c0_i32, %c0_i32_0 : i32, i32, i32
  }
  func.func @transform_1(%arg0: i32) -> (i32, i32) {
    %c0_i32 = arith.constant 0 : i32
    %c0_i32_0 = arith.constant 0 : i32
    %c0_i32_1 = arith.constant 0 : i32
    return %c0_i32, %c0_i32_0 : i32, i32
  }
  func.func @transform_2(%arg0: i32) -> (i32, i32) {
    %c0_i32 = arith.constant 0 : i32
    %c0_i32_0 = arith.constant 0 : i32
    %c0_i32_1 = arith.constant 0 : i32
    return %c0_i32, %c0_i32_0 : i32, i32
  }
  func.func @transform_3(%arg0: i32) -> (i32, i32, i32) {
    %c0_i32 = arith.constant 0 : i32
    %c0_i32_0 = arith.constant 0 : i32
    %c0_i32_1 = arith.constant 0 : i32
    return %arg0, %c0_i32, %c0_i32_0 : i32, i32, i32
  }
}

</mosaic_0001>

<llo_original>
// kernel: tpu_custom_call.1
$region0: #{tpu_custom_call.1}
  #allocation0 [shape = 'u32[]', space=smem, size = 0x4, offset = 0x4, fixed_abs, tag = 'smem constant byte address 0x4 - core index']
  #allocation1 [shape = 'u32[144,128]{1,0:T(1,128)}', space=vmem, size = 0x12000, scoped, tag = 'internal scratch']
  %s0 = inlined_call_operand.hbm [shape: bf16[2,24,64], index: 0, kind: input, shape index: {}]
  %s1 = inlined_call_operand.hbm [shape: bf16[64,128], index: 1, kind: input, shape index: {}]
  %s2 = inlined_call_operand.hbm [shape: f32[24,128], index: 2, kind: input, shape index: {}]
  %s3 = inlined_call_operand.hbm [shape: f32[2,24,128], index: 3, kind: output, shape index: {}]
  %s4 = sld [smem:[#allocation0]]
  $region57: #{tpu_custom_call.1} parent=0
    _
  %s6 = ssub.s32 1, %s4
  %s7 = scalar_select 0, %s6, %s4
  $region1: #{tpu_custom_call.1} parent=0
    #allocation2 [shape = 'u8[12288]{0}', space=vmem, size = 0x3000, scoped, tag = 'input window, operand 0']
    #allocation3 [shape = 's32[2]{0}', space=sflag, size = 0x8, scoped, tag = 'scoped memory for tpu_custom_call.1']
    #allocation4 [shape = 's32[2]{0}', space=sflag, size = 0x8, scoped, tag = 'scoped memory for tpu_custom_call.1']
    #allocation5 [shape = 'u8[16384]{0}', space=vmem, size = 0x4000, scoped, tag = 'input window, operand 1, single buffered']
    #allocation6 [shape = 's32[1]{0}', space=sflag, size = 0x4, scoped, tag = 'scoped memory for tpu_custom_call.1']
    #allocation7 [shape = 'u8[12288]{0}', space=vmem, size = 0x3000, scoped, tag = 'input window, operand 2, single buffered']
    #allocation8 [shape = 'u8[24576]{0}', space=vmem, size = 0x6000, scoped, tag = 'output window, operand 0']
    %8 = vsyncpa [#allocation3], 0
    %s9 = scalar_lea.sflag [#allocation3], 1
    %10 = vsyncpa %s9, 0
    %11 = vsyncpa [#allocation6], 0
    %12 = vsyncpa [#allocation4], 0
    %s13 = scalar_lea.sflag [#allocation4], 1
    %14 = vsyncpa %s13, 0
    loop: start=0, step=1, limit=4
    $region2: #{tpu_custom_call.1} parent=1 // loop_pre_header
      _
    $region3: #{tpu_custom_call.1} parent=1 // loop_header
      %s16 = sphi 0, %s20
      %p17 = scmp.ge.s32.totalorder %s16, 4
      %s26 = sphi 0, %s28
      %s29 = sphi 0, %s26
      %s30 = sphi 0, %s29
      %s46 = sphi 0, %s30
      %s50 = sphi 0, %s50
      %s52 = sphi 0, %s50
      %s53 = sphi 0, %s52
      %s67 = sphi 0, %s53
      %s71 = sphi 0, %s71
      %s73 = sphi 0, %s71
      %s74 = sphi 0, %s73
      %s88 = sphi 0, %s74
      %s94 = sphi 0, %s96
      %s97 = sphi 0, %s94
      %s98 = sphi 0, %s97
      %s114 = sphi 0, %s98
    $region4: #{tpu_custom_call.1} parent=1 // loop_header_branch
      %19 = sbr.rel (%p17) target = $region8
    $region5: #{tpu_custom_call.1} parent=1 // loop_body
      %s21 = ssub.s32 %s16, 1
      %s22 = ssub.s32 %s16, 2
      %s23 = sadd.s32 %s16, 1
      %s24 = ssub.s32 %s16, %s23
      %p25 = scmp.eq.s32.totalorder %s24, 0
      %s27 = sadd.s32 %s26, 1
      %s28 = scalar_select %p25, %s26, %s27
      %p31 = pneg %p25
      %p32 = scmp.eq.s32.totalorder %s16, 1
      %p33 = por %p31, %p32
      %p34 = scmp.ne.s32.totalorder %s26, %s29
      %p35 = scmp.eq.s32.totalorder %s16, 0
      %p36 = por %p34, %p35
      %p37 = scmp.ne.s32.totalorder %s26, %s29
      %p38 = scmp.eq.s32.totalorder %s21, 1
      %p39 = por %p37, %p38
      %p40 = scmp.ne.s32.totalorder %s29, %s30
      %p41 = scmp.eq.s32.totalorder %s21, 0
      %p42 = por %p40, %p41
      %p43 = scmp.ne.s32.totalorder %s29, %s30
      %p44 = scmp.eq.s32.totalorder %s22, 1
      %p45 = por %p43, %p44
      %p47 = scmp.ne.s32.totalorder %s30, %s46
      %p48 = scmp.eq.s32.totalorder %s22, 0
      %p49 = por %p47, %p48
      %s51 = sadd.s32 %s50, 1
      %p54 = scmp.eq.s32.totalorder %s16, 1
      %p55 = scmp.ne.s32.totalorder %s50, %s52
      %p56 = scmp.eq.s32.totalorder %s16, 0
      %p57 = por %p55, %p56
      %p58 = scmp.ne.s32.totalorder %s50, %s52
      %p59 = scmp.eq.s32.totalorder %s21, 1
      %p60 = por %p58, %p59
      %p61 = scmp.ne.s32.totalorder %s52, %s53
      %p62 = scmp.eq.s32.totalorder %s21, 0
      %p63 = por %p61, %p62
      %p64 = scmp.ne.s32.totalorder %s52, %s53
      %p65 = scmp.eq.s32.totalorder %s22, 1
      %p66 = por %p64, %p65
      %p68 = scmp.ne.s32.totalorder %s53, %s67
      %p69 = scmp.eq.s32.totalorder %s22, 0
      %p70 = por %p68, %p69
      %s72 = sadd.s32 %s71, 1
      %p75 = scmp.eq.s32.totalorder %s16, 1
      %p76 = scmp.ne.s32.totalorder %s71, %s73
      %p77 = scmp.eq.s32.totalorder %s16, 0
      %p78 = por %p76, %p77
      %p79 = scmp.ne.s32.totalorder %s71, %s73
      %p80 = scmp.eq.s32.totalorder %s21, 1
      %p81 = por %p79, %p80
      %p82 = scmp.ne.s32.totalorder %s73, %s74
      %p83 = scmp.eq.s32.totalorder %s21, 0
      %p84 = por %p82, %p83
      %p85 = scmp.ne.s32.totalorder %s73, %s74
      %p86 = scmp.eq.s32.totalorder %s22, 1
      %p87 = por %p85, %p86
      %p89 = scmp.ne.s32.totalorder %s74, %s88
      %p90 = scmp.eq.s32.totalorder %s22, 0
      %p91 = por %p89, %p90
      %s92 = ssub.s32 %s16, %s23
      %p93 = scmp.eq.s32.totalorder %s92, 0
      %s95 = sadd.s32 %s94, 1
      %s96 = scalar_select %p93, %s94, %s95
      %p99 = pneg %p93
      %p100 = scmp.eq.s32.totalorder %s16, 1
      %p101 = por %p99, %p100
      %p102 = scmp.ne.s32.totalorder %s94, %s97
      %p103 = scmp.eq.s32.totalorder %s16, 0
      %p104 = por %p102, %p103
      %p105 = scmp.ne.s32.totalorder %s94, %s97
      %p106 = scmp.eq.s32.totalorder %s21, 1
      %p107 = por %p105, %p106
      %p108 = scmp.ne.s32.totalorder %s97, %s98
      %p109 = scmp.eq.s32.totalorder %s21, 0
      %p110 = por %p108, %p109
      %p111 = scmp.ne.s32.totalorder %s97, %s98
      %p112 = scmp.eq.s32.totalorder %s22, 1
      %p113 = por %p111, %p112
      %p115 = scmp.ne.s32.totalorder %s98, %s114
      %p116 = scmp.eq.s32.totalorder %s22, 0
      %p117 = por %p115, %p116
      %p118 = scmp.le.s32.totalorder 1, %s16
      %p119 = scmp.lt.s32.totalorder %s16, 3
      %p120 = pnand %p118, %p119
      %p121 = pneg %p120
      // Predicated region
      $region9: #{tpu_custom_call.1} parent=5 // pred_check
        _
      $region10: #{tpu_custom_call.1} parent=5 // pred_check_branch
        %123 = sbr.rel (%p120) target = $region12
      $region11: #{tpu_custom_call.1} parent=5 // pred_region
        %s124 = ssub.s32 %s16, 1
        // Predicated region
        $region13: #{tpu_custom_call.1} parent=11 // pred_check
          %p125 = pneg %p63
        $region14: #{tpu_custom_call.1} parent=11 // pred_check_branch
          %127 = sbr.rel (%p125) target = $region16
        $region15: #{tpu_custom_call.1} parent=11 // pred_region
          %s129 = ssub.s32 512, 512
          %130 = vsyncadd [#allocation6], %s129
          %s131 = sshll.u32 [#allocation5], 4
          %s132 = int_to_ptr.vmem [resolvable:$true] %s131
          %137 = dma.hbm_to_vmem [thread:$0]  %s1, 512, %s132, [#allocation6], 64, 64, 4
        $region16: #{tpu_custom_call.1} parent=11 // pred_fallthru
          _
        // Predicated region
        $region17: #{tpu_custom_call.1} parent=11 // pred_check
          %p138 = pneg %p84
        $region18: #{tpu_custom_call.1} parent=11 // pred_check_branch
          %140 = sbr.rel (%p138) target = $region20
        $region19: #{tpu_custom_call.1} parent=11 // pred_region
          %s142 = ssub.s32 384, 384
          %143 = vsyncadd [#allocation6], %s142
          %s144 = sshll.u32 [#allocation7], 4
          %s145 = int_to_ptr.vmem [resolvable:$true] %s144
          %150 = dma.hbm_to_vmem [thread:$0]  %s2, 384, %s145, [#allocation6], 128, 128, 8
        $region20: #{tpu_custom_call.1} parent=11 // pred_fallthru
          _
      $region12: #{tpu_custom_call.1} parent=5 // pred_fallthru
        _
      %p151 = scmp.lt.s32.totalorder %s16, 2
      // Predicated region
      $region21: #{tpu_custom_call.1} parent=5 // pred_check
        %p152 = pneg %p151
      $region22: #{tpu_custom_call.1} parent=5 // pred_check_branch
        %154 = sbr.rel (%p152) target = $region24
      $region23: #{tpu_custom_call.1} parent=5 // pred_region
        // Predicated region
        $region25: #{tpu_custom_call.1} parent=23 // pred_check
          %p155 = pneg %p36
        $region26: #{tpu_custom_call.1} parent=23 // pred_check_branch
          %157 = sbr.rel (%p155) target = $region28
        $region27: #{tpu_custom_call.1} parent=23 // pred_region
          %s158 = sand.u32 %s26, 1
          %s159 = scalar_lea.sflag [#allocation3], %s158
          %s160 = sand.u32 %s26, 1
          %s161 = smul.addr %s160, 12
          %s162 = scalar_lea.vmem [#allocation2], %s161
          %s164 = ssub.s32 192, 192
          %165 = vsyncadd %s159, %s164
          %s166 = smul.addr %s16, 3
          %s167 = smul.addr %s166, 64
          %s168 = scalar_lea.hbm %s0, %s167
          %s169 = sshll.u32 %s162, 4
          %s170 = int_to_ptr.vmem [resolvable:$true] %s169
          %175 = dma.hbm_to_vmem [thread:$0]  %s168, 192, %s170, %s159, 64, 64, 4
        $region28: #{tpu_custom_call.1} parent=23 // pred_fallthru
          _
      $region24: #{tpu_custom_call.1} parent=5 // pred_fallthru
        _
      %p176 = scmp.le.s32.totalorder 1, %s16
      %p177 = scmp.lt.s32.totalorder %s16, 3
      %p178 = pnand %p176, %p177
      %p179 = pneg %p178
      // Predicated region
      $region29: #{tpu_custom_call.1} parent=5 // pred_check
        _
      $region30: #{tpu_custom_call.1} parent=5 // pred_check_branch
        %181 = sbr.rel (%p178) target = $region32
      $region31: #{tpu_custom_call.1} parent=5 // pred_region
        %s182 = ssub.s32 %s16, 1
        %s183 = sand.u32 %s29, 1
        %s184 = scalar_lea.sflag [#allocation3], %s183
        %s185 = sand.u32 %s29, 1
        %s186 = smul.addr %s185, 12
        %s187 = scalar_lea.vmem [#allocation2], %s186
        // Predicated region
        $region33: #{tpu_custom_call.1} parent=31 // pred_check
          %p188 = pneg %p42
        $region34: #{tpu_custom_call.1} parent=31 // pred_check_branch
          %190 = sbr.rel (%p188) target = $region36
        $region35: #{tpu_custom_call.1} parent=31 // pred_region
          %191 = dma.done %s184, 192
        $region36: #{tpu_custom_call.1} parent=31 // pred_fallthru
          _
        // Predicated region
        $region37: #{tpu_custom_call.1} parent=31 // pred_check
          %p192 = pneg %p63
        $region38: #{tpu_custom_call.1} parent=31 // pred_check_branch
          %194 = sbr.rel (%p192) target = $region40
        $region39: #{tpu_custom_call.1} parent=31 // pred_region
          %195 = dma.done [#allocation6], 512
        $region40: #{tpu_custom_call.1} parent=31 // pred_fallthru
          _
        // Predicated region
        $region41: #{tpu_custom_call.1} parent=31 // pred_check
          %p196 = pneg %p84
        $region42: #{tpu_custom_call.1} parent=31 // pred_check_branch
          %198 = sbr.rel (%p196) target = $region44
        $region43: #{tpu_custom_call.1} parent=31 // pred_region
          %199 = dma.done [#allocation6], 384
        $region44: #{tpu_custom_call.1} parent=31 // pred_fallthru
          _
        %s200 = sand.u32 %s29, 1
        %s201 = scalar_lea.sflag [#allocation3], %s200
        %s202 = sand.u32 %s29, 1
        %s203 = smul.addr %s202, 12
        %s204 = scalar_lea.vmem [#allocation2], %s203
        %p205 = pneg %p42
        %p206 = pneg %p39
        %p207 = pneg %p63
        %p208 = pneg %p60
        %p209 = pneg %p84
        %p210 = pneg %p81
        %p211 = pneg %p110
        %p212 = pneg %p107
        %s213 = sand.u32 %s97, 1
        %s214 = scalar_lea.sflag [#allocation4], %s213
        %s215 = sand.u32 %s97, 1
        %s216 = smul.addr %s215, 24
        %s217 = scalar_lea.vmem [#allocation8], %s216
        %v219 = vld [vmem:[%s187] sm:$0xf]
        %v220 = vld [vmem:[%s187 + $0x4] sm:$0xf]
        %v221 = vld [vmem:[%s187 + $0x8] sm:$0xf]
        %v222 = vld [vmem:[#allocation5] sm:$0xf]
        %v223 = vld [vmem:[#allocation5 + $0x4] sm:$0xf]
        %v224 = vld [vmem:[#allocation5 + $0x8] sm:$0xf]
        %v225 = vld [vmem:[#allocation5 + $0xc] sm:$0xf]
        %v226 = vld [vmem:[#allocation5 + $0x10] sm:$0xf]
        %v227 = vld [vmem:[#allocation5 + $0x14] sm:$0xf]
        %v228 = vld [vmem:[#allocation5 + $0x18] sm:$0xf]
        %v229 = vld [vmem:[#allocation5 + $0x1c] sm:$0xf]
        %v233 = vunpack.c.l.b16 %v219
        %v234 = vunpack.c.l.b16 %v220
        %v235 = vunpack.c.l.b16 %v221
        %v236 = vpack.c.b16 %v234, %v233
        %v237 = vpack.c.b16 %v235, %v235
        %v246 = vunpack.c.l.b16 %v222
        %v247 = vunpack.c.l.b16 %v223
        %v248 = vunpack.c.l.b16 %v224
        %v249 = vunpack.c.l.b16 %v225
        %v250 = vunpack.c.l.b16 %v226
        %v251 = vunpack.c.l.b16 %v227
        %v252 = vunpack.c.l.b16 %v228
        %v253 = vunpack.c.l.b16 %v229
        %v254 = vpack.c.b16 %v247, %v246
        %v255 = vpack.c.b16 %v249, %v248
        %v256 = vpack.c.b16 %v251, %v250
        %v257 = vpack.c.b16 %v253, %v252
        %vm262 = vcmask 523264
        %v264 = vsel %vm262, %v236, 0
        %v267 = vsel %vm262, %v237, 0
        %269 = vmatprep.subr.bf16.mxu0 0
        %270 = vmatpush1.bf16.msra.mxu0 %v254
        %271 = vmatprep.subr.bf16.mxu0 0
        %272 = vmatpush1.bf16.msra.mxu0 %v255
        %273 = vmatprep.subr.bf16.mxu0 0
        %274 = vmatpush1.bf16.msra.mxu0 %v256
        %275 = vmatprep.subr.bf16.mxu0 0
        %276 = vmatpush1.bf16.msra.mxu0 %v257
        %277 = vmatprep.subr.bf16.mxu0 0
        %278 = vmatpush1.bf16.msra.mxu0 0
        %279 = vmatprep.subr.bf16.mxu0 0
        %280 = vmatpush1.bf16.msra.mxu0 0
        %281 = vmatprep.subr.bf16.mxu0 0
        %282 = vmatpush1.bf16.msra.mxu0 0
        %283 = vmatprep.subr.bf16.mxu0 0
        %284 = vmatpush1.bf16.msra.mxu0 0
        %285 = vmatprep.subr.bf16.mxu0 0
        %286 = vmatpush1.bf16.msra.mxu0 0
        %287 = vmatprep.subr.bf16.mxu0 0
        %288 = vmatpush1.bf16.msra.mxu0 0
        %289 = vmatprep.subr.bf16.mxu0 0
        %290 = vmatpush1.bf16.msra.mxu0 0
        %291 = vmatprep.subr.bf16.mxu0 0
        %292 = vmatpush1.bf16.msra.mxu0 0
        %293 = vmatprep.subr.bf16.mxu0 0
        %294 = vmatpush1.bf16.msra.mxu0 0
        %295 = vmatprep.subr.bf16.mxu0 0
        %296 = vmatpush1.bf16.msra.mxu0 0
        %297 = vmatprep.subr.bf16.mxu0 0
        %298 = vmatpush1.bf16.msra.mxu0 0
        %299 = vmatprep.subr.bf16.mxu0 0
        %300 = vmatpush1.bf16.msra.mxu0 0
        %301 = vmatprep.mubr.bf16.mxu0 0
        %302 = vmatmul.mubr.bf16.gmra.mrb[0].mxu0 %v264
        %v303 = vpop.f32.mrb[0].mxu0
        %v304 = vadd.f32 0.0, %v303
        %v305 = vpop.f32.mrb[0].mxu0
        %v306 = vpop.f32.mrb[0].mxu0
        %v307 = vadd.f32 0.0, %v306
        %v308 = vpop.f32.mrb[0].mxu0
        %309 = vmatprep.mubr.bf16.mxu0 0
        %310 = vmatmul.mubr.bf16.gmra.mrb[0].mxu0 %v267
        %v311 = vpop.f32.mrb[0].mxu0
        %v312 = vadd.f32 0.0, %v311
        %v313 = vpop.f32.mrb[0].mxu0
        %v314 = vpop.f32.mrb[0].mxu0
        %v315 = vpop.f32.mrb[0].mxu0
        %316 = vdwg.mxu0
        %v317 = vld [vmem:[#allocation7] sm:$0xff]
        %v318 = vld [vmem:[#allocation7 + $0x8] sm:$0xff]
        %v319 = vld [vmem:[#allocation7 + $0x10] sm:$0xff]
        %v320 = vadd.f32 %v304, %v317
        %v321 = vadd.f32 %v307, %v318
        %v322 = vadd.f32 %v312, %v319
        %323 = vst [vmem:[%s217] sm:$0xff] %v320
        %324 = vst [vmem:[%s217 + $0x8] sm:$0xff] %v321
        %325 = vst [vmem:[%s217 + $0x10] sm:$0xff] %v322
        %s326 = sand.u32 %s97, 1
        %s327 = scalar_lea.sflag [#allocation4], %s326
        %s328 = sand.u32 %s97, 1
        %s329 = smul.addr %s328, 24
        %s330 = scalar_lea.vmem [#allocation8], %s329
        // Predicated region
        $region45: #{tpu_custom_call.1} parent=31 // pred_check
          %p331 = pneg %p107
        $region46: #{tpu_custom_call.1} parent=31 // pred_check_branch
          %333 = sbr.rel (%p331) target = $region48
        $region47: #{tpu_custom_call.1} parent=31 // pred_region
          %s335 = ssub.s32 384, 384
          %336 = vsyncadd %s327, %s335
          %s337 = smul.addr %s21, 3
          %s338 = smul.addr %s337, 128
          %s339 = scalar_lea.hbm %s3, %s338
          %s340 = sshll.u32 %s330, 4
          %s341 = int_to_ptr.vmem [resolvable:$true] %s340
          %346 = dma.vmem_to_hbm [thread:$0]  %s341, 384, %s339, %s327, 128, 128, 8
        $region48: #{tpu_custom_call.1} parent=31 // pred_fallthru
          _
      $region32: #{tpu_custom_call.1} parent=5 // pred_fallthru
        _
      %p347 = scmp.le.s32.totalorder 2, %s16
      // Predicated region
      $region49: #{tpu_custom_call.1} parent=5 // pred_check
        %p348 = pneg %p347
      $region50: #{tpu_custom_call.1} parent=5 // pred_check_branch
        %350 = sbr.rel (%p348) target = $region52
      $region51: #{tpu_custom_call.1} parent=5 // pred_region
        %s351 = ssub.s32 %s16, 2
        // Predicated region
        $region53: #{tpu_custom_call.1} parent=51 // pred_check
          %p352 = pneg %p113
        $region54: #{tpu_custom_call.1} parent=51 // pred_check_branch
          %354 = sbr.rel (%p352) target = $region56
        $region55: #{tpu_custom_call.1} parent=51 // pred_region
          %s355 = sand.u32 %s98, 1
          %s356 = scalar_lea.sflag [#allocation4], %s355
          %s357 = sand.u32 %s98, 1
          %s358 = smul.addr %s357, 24
          %s359 = scalar_lea.vmem [#allocation8], %s358
          %360 = dma.done %s356, 384
        $region56: #{tpu_custom_call.1} parent=51 // pred_fallthru
          _
      $region52: #{tpu_custom_call.1} parent=5 // pred_fallthru
        _
    $region6: #{tpu_custom_call.1} parent=1 // loop_footer
      %s20 = sadd.s32 1, %s16
    $region7: #{tpu_custom_call.1} parent=1 // loop_footer_branch
      %15 = sbr.rel target = $region3
    $region8: #{tpu_custom_call.1} parent=1 // loop_exit
      _
    %361 = vsyncpa [#allocation3], 1
    %s362 = scalar_lea.sflag [#allocation3], 1
    %363 = vsyncpa %s362, 1
    %364 = vsyncpa [#allocation6], 1
    %365 = vsyncpa [#allocation4], 1
    %s366 = scalar_lea.sflag [#allocation4], 1
    %367 = vsyncpa %s366, 1

// kernel: tpu_custom_call.1
$region0: #{tpu_custom_call.1}
  #allocation0 [shape = 'u32[]', space=smem, size = 0x4, offset = 0x4, fixed_abs, tag = 'smem constant byte address 0x4 - core index']
  #allocation1 [shape = 'u32[144,128]{1,0:T(1,128)}', space=vmem, size = 0x12000, scoped, tag = 'internal scratch']
  %s0 = inlined_call_operand.hbm [shape: bf16[2,24,64], index: 0, kind: input, shape index: {}]
  %s1 = inlined_call_operand.hbm [shape: bf16[64,128], index: 1, kind: input, shape index: {}]
  %s2 = inlined_call_operand.hbm [shape: f32[24,128], index: 2, kind: input, shape index: {}]
  %s3 = inlined_call_operand.hbm [shape: f32[2,24,128], index: 3, kind: output, shape index: {}]
  %s4 = sld [smem:[#allocation0]]
  $region57: #{tpu_custom_call.1} parent=0
    _
  %s6 = ssub.s32 1, %s4
  %s7 = scalar_select 0, %s6, %s4
  $region1: #{tpu_custom_call.1} parent=0
    #allocation2 [shape = 'u8[12288]{0}', space=vmem, size = 0x3000, scoped, tag = 'input window, operand 0']
    #allocation3 [shape = 's32[2]{0}', space=sflag, size = 0x8, scoped, tag = 'scoped memory for tpu_custom_call.1']
    #allocation4 [shape = 's32[2]{0}', space=sflag, size = 0x8, scoped, tag = 'scoped memory for tpu_custom_call.1']
    #allocation5 [shape = 'u8[16384]{0}', space=vmem, size = 0x4000, scoped, tag = 'input window, operand 1, single buffered']
    #allocation6 [shape = 's32[1]{0}', space=sflag, size = 0x4, scoped, tag = 'scoped memory for tpu_custom_call.1']
    #allocation7 [shape = 'u8[12288]{0}', space=vmem, size = 0x3000, scoped, tag = 'input window, operand 2, single buffered']
    #allocation8 [shape = 'u8[24576]{0}', space=vmem, size = 0x6000, scoped, tag = 'output window, operand 0']
    %8 = vsyncpa [#allocation3], 0
    %s9 = scalar_lea.sflag [#allocation3], 1
    %10 = vsyncpa %s9, 0
    %11 = vsyncpa [#allocation6], 0
    %12 = vsyncpa [#allocation4], 0
    %s13 = scalar_lea.sflag [#allocation4], 1
    %14 = vsyncpa %s13, 0
    loop: start=0, step=1, limit=4
    $region2: #{tpu_custom_call.1} parent=1 // loop_pre_header
      _
    $region3: #{tpu_custom_call.1} parent=1 // loop_header
      %s16 = sphi 0, %s20
      %p17 = scmp.ge.s32.totalorder %s16, 4
      %s26 = sphi 0, %s28
      %s29 = sphi 0, %s26
      %s30 = sphi 0, %s29
      %s46 = sphi 0, %s30
      %s50 = sphi 0, %s50
      %s52 = sphi 0, %s50
      %s53 = sphi 0, %s52
      %s67 = sphi 0, %s53
      %s71 = sphi 0, %s71
      %s73 = sphi 0, %s71
      %s74 = sphi 0, %s73
      %s88 = sphi 0, %s74
      %s94 = sphi 0, %s96
      %s97 = sphi 0, %s94
      %s98 = sphi 0, %s97
      %s114 = sphi 0, %s98
    $region4: #{tpu_custom_call.1} parent=1 // loop_header_branch
      %19 = sbr.rel (%p17) target = $region8
    $region5: #{tpu_custom_call.1} parent=1 // loop_body
      %s21 = ssub.s32 %s16, 1
      %s22 = ssub.s32 %s16, 2
      %s23 = sadd.s32 %s16, 1
      %s24 = ssub.s32 %s16, %s23
      %p25 = scmp.eq.s32.totalorder %s24, 0
      %s27 = sadd.s32 %s26, 1
      %s28 = scalar_select %p25, %s26, %s27
      %p31 = pneg %p25
      %p32 = scmp.eq.s32.totalorder %s16, 1
      %p33 = por %p31, %p32
      %p34 = scmp.ne.s32.totalorder %s26, %s29
      %p35 = scmp.eq.s32.totalorder %s16, 0
      %p36 = por %p34, %p35
      %p37 = scmp.ne.s32.totalorder %s26, %s29
      %p38 = scmp.eq.s32.totalorder %s21, 1
      %p39 = por %p37, %p38
      %p40 = scmp.ne.s32.totalorder %s29, %s30
      %p41 = scmp.eq.s32.totalorder %s21, 0
      %p42 = por %p40, %p41
      %p43 = scmp.ne.s32.totalorder %s29, %s30
      %p44 = scmp.eq.s32.totalorder %s22, 1
      %p45 = por %p43, %p44
      %p47 = scmp.ne.s32.totalorder %s30, %s46
      %p48 = scmp.eq.s32.totalorder %s22, 0
      %p49 = por %p47, %p48
      %s51 = sadd.s32 %s50, 1
      %p54 = scmp.eq.s32.totalorder %s16, 1
      %p55 = scmp.ne.s32.totalorder %s50, %s52
      %p56 = scmp.eq.s32.totalorder %s16, 0
      %p57 = por %p55, %p56
      %p58 = scmp.ne.s32.totalorder %s50, %s52
      %p59 = scmp.eq.s32.totalorder %s21, 1
      %p60 = por %p58, %p59
      %p61 = scmp.ne.s32.totalorder %s52, %s53
      %p62 = scmp.eq.s32.totalorder %s21, 0
      %p63 = por %p61, %p62
      %p64 = scmp.ne.s32.totalorder %s52, %s53
      %p65 = scmp.eq.s32.totalorder %s22, 1
      %p66 = por %p64, %p65
      %p68 = scmp.ne.s32.totalorder %s53, %s67
      %p69 = scmp.eq.s32.totalorder %s22, 0
      %p70 = por %p68, %p69
      %s72 = sadd.s32 %s71, 1
      %p75 = scmp.eq.s32.totalorder %s16, 1
      %p76 = scmp.ne.s32.totalorder %s71, %s73
      %p77 = scmp.eq.s32.totalorder %s16, 0
      %p78 = por %p76, %p77
      %p79 = scmp.ne.s32.totalorder %s71, %s73
      %p80 = scmp.eq.s32.totalorder %s21, 1
      %p81 = por %p79, %p80
      %p82 = scmp.ne.s32.totalorder %s73, %s74
      %p83 = scmp.eq.s32.totalorder %s21, 0
      %p84 = por %p82, %p83
      %p85 = scmp.ne.s32.totalorder %s73, %s74
      %p86 = scmp.eq.s32.totalorder %s22, 1
      %p87 = por %p85, %p86
      %p89 = scmp.ne.s32.totalorder %s74, %s88
      %p90 = scmp.eq.s32.totalorder %s22, 0
      %p91 = por %p89, %p90
      %s92 = ssub.s32 %s16, %s23
      %p93 = scmp.eq.s32.totalorder %s92, 0
      %s95 = sadd.s32 %s94, 1
      %s96 = scalar_select %p93, %s94, %s95
      %p99 = pneg %p93
      %p100 = scmp.eq.s32.totalorder %s16, 1
      %p101 = por %p99, %p100
      %p102 = scmp.ne.s32.totalorder %s94, %s97
      %p103 = scmp.eq.s32.totalorder %s16, 0
      %p104 = por %p102, %p103
      %p105 = scmp.ne.s32.totalorder %s94, %s97
      %p106 = scmp.eq.s32.totalorder %s21, 1
      %p107 = por %p105, %p106
      %p108 = scmp.ne.s32.totalorder %s97, %s98
      %p109 = scmp.eq.s32.totalorder %s21, 0
      %p110 = por %p108, %p109
      %p111 = scmp.ne.s32.totalorder %s97, %s98
      %p112 = scmp.eq.s32.totalorder %s22, 1
      %p113 = por %p111, %p112
      %p115 = scmp.ne.s32.totalorder %s98, %s114
      %p116 = scmp.eq.s32.totalorder %s22, 0
      %p117 = por %p115, %p116
      %p118 = scmp.le.s32.totalorder 1, %s16
      %p119 = scmp.lt.s32.totalorder %s16, 3
      %p120 = pnand %p118, %p119
      %p121 = pneg %p120
      // Predicated region
      $region9: #{tpu_custom_call.1} parent=5 // pred_check
        _
      $region10: #{tpu_custom_call.1} parent=5 // pred_check_branch
        %123 = sbr.rel (%p120) target = $region12
      $region11: #{tpu_custom_call.1} parent=5 // pred_region
        %s124 = ssub.s32 %s16, 1
        // Predicated region
        $region13: #{tpu_custom_call.1} parent=11 // pred_check
          %p125 = pneg %p63
        $region14: #{tpu_custom_call.1} parent=11 // pred_check_branch
          %127 = sbr.rel (%p125) target = $region16
        $region15: #{tpu_custom_call.1} parent=11 // pred_region
          %s129 = ssub.s32 512, 512
          %130 = vsyncadd [#allocation6], %s129
          %s131 = sshll.u32 [#allocation5], 4
          %s132 = int_to_ptr.vmem [resolvable:$true] %s131
          %137 = dma.hbm_to_vmem [thread:$0]  %s1, 512, %s132, [#allocation6], 64, 64, 4
        $region16: #{tpu_custom_call.1} parent=11 // pred_fallthru
          _
        // Predicated region
        $region17: #{tpu_custom_call.1} parent=11 // pred_check
          %p138 = pneg %p84
        $region18: #{tpu_custom_call.1} parent=11 // pred_check_branch
          %140 = sbr.rel (%p138) target = $region20
        $region19: #{tpu_custom_call.1} parent=11 // pred_region
          %s142 = ssub.s32 384, 384
          %143 = vsyncadd [#allocation6], %s142
          %s144 = sshll.u32 [#allocation7], 4
          %s145 = int_to_ptr.vmem [resolvable:$true] %s144
          %150 = dma.hbm_to_vmem [thread:$0]  %s2, 384, %s145, [#allocation6], 128, 128, 8
        $region20: #{tpu_custom_call.1} parent=11 // pred_fallthru
          _
      $region12: #{tpu_custom_call.1} parent=5 // pred_fallthru
        _
      %p151 = scmp.lt.s32.totalorder %s16, 2
      // Predicated region
      $region21: #{tpu_custom_call.1} parent=5 // pred_check
        %p152 = pneg %p151
      $region22: #{tpu_custom_call.1} parent=5 // pred_check_branch
        %154 = sbr.rel (%p152) target = $region24
      $region23: #{tpu_custom_call.1} parent=5 // pred_region
        // Predicated region
        $region25: #{tpu_custom_call.1} parent=23 // pred_check
          %p155 = pneg %p36
        $region26: #{tpu_custom_call.1} parent=23 // pred_check_branch
          %157 = sbr.rel (%p155) target = $region28
        $region27: #{tpu_custom_call.1} parent=23 // pred_region
          %s158 = sand.u32 %s26, 1
          %s159 = scalar_lea.sflag [#allocation3], %s158
          %s160 = sand.u32 %s26, 1
          %s161 = smul.addr %s160, 12
          %s162 = scalar_lea.vmem [#allocation2], %s161
          %s164 = ssub.s32 192, 192
          %165 = vsyncadd %s159, %s164
          %s166 = smul.addr %s16, 3
          %s167 = smul.addr %s166, 64
          %s168 = scalar_lea.hbm %s0, %s167
          %s169 = sshll.u32 %s162, 4
          %s170 = int_to_ptr.vmem [resolvable:$true] %s169
          %175 = dma.hbm_to_vmem [thread:$0]  %s168, 192, %s170, %s159, 64, 64, 4
        $region28: #{tpu_custom_call.1} parent=23 // pred_fallthru
          _
      $region24: #{tpu_custom_call.1} parent=5 // pred_fallthru
        _
      %p176 = scmp.le.s32.totalorder 1, %s16
      %p177 = scmp.lt.s32.totalorder %s16, 3
      %p178 = pnand %p176, %p177
      %p179 = pneg %p178
      // Predicated region
      $region29: #{tpu_custom_call.1} parent=5 // pred_check
        _
      $region30: #{tpu_custom_call.1} parent=5 // pred_check_branch
        %181 = sbr.rel (%p178) target = $region32
      $region31: #{tpu_custom_call.1} parent=5 // pred_region
        %s182 = ssub.s32 %s16, 1
        %s183 = sand.u32 %s29, 1
        %s184 = scalar_lea.sflag [#allocation3], %s183
        %s185 = sand.u32 %s29, 1
        %s186 = smul.addr %s185, 12
        %s187 = scalar_lea.vmem [#allocation2], %s186
        // Predicated region
        $region33: #{tpu_custom_call.1} parent=31 // pred_check
          %p188 = pneg %p42
        $region34: #{tpu_custom_call.1} parent=31 // pred_check_branch
          %190 = sbr.rel (%p188) target = $region36
        $region35: #{tpu_custom_call.1} parent=31 // pred_region
          %191 = dma.done %s184, 192
        $region36: #{tpu_custom_call.1} parent=31 // pred_fallthru
          _
        // Predicated region
        $region37: #{tpu_custom_call.1} parent=31 // pred_check
          %p192 = pneg %p63
        $region38: #{tpu_custom_call.1} parent=31 // pred_check_branch
          %194 = sbr.rel (%p192) target = $region40
        $region39: #{tpu_custom_call.1} parent=31 // pred_region
          %195 = dma.done [#allocation6], 512
        $region40: #{tpu_custom_call.1} parent=31 // pred_fallthru
          _
        // Predicated region
        $region41: #{tpu_custom_call.1} parent=31 // pred_check
          %p196 = pneg %p84
        $region42: #{tpu_custom_call.1} parent=31 // pred_check_branch
          %198 = sbr.rel (%p196) target = $region44
        $region43: #{tpu_custom_call.1} parent=31 // pred_region
          %199 = dma.done [#allocation6], 384
        $region44: #{tpu_custom_call.1} parent=31 // pred_fallthru
          _
        %s200 = sand.u32 %s29, 1
        %s201 = scalar_lea.sflag [#allocation3], %s200
        %s202 = sand.u32 %s29, 1
        %s203 = smul.addr %s202, 12
        %s204 = scalar_lea.vmem [#allocation2], %s203
        %p205 = pneg %p42
        %p206 = pneg %p39
        %p207 = pneg %p63
        %p208 = pneg %p60
        %p209 = pneg %p84
        %p210 = pneg %p81
        %p211 = pneg %p110
        %p212 = pneg %p107
        %s213 = sand.u32 %s97, 1
        %s214 = scalar_lea.sflag [#allocation4], %s213
        %s215 = sand.u32 %s97, 1
        %s216 = smul.addr %s215, 24
        %s217 = scalar_lea.vmem [#allocation8], %s216
        %v219 = vld [vmem:[%s187] sm:$0xf]
        %v220 = vld [vmem:[%s187 + $0x4] sm:$0xf]
        %v221 = vld [vmem:[%s187 + $0x8] sm:$0xf]
        %v222 = vld [vmem:[#allocation5] sm:$0xf]
        %v223 = vld [vmem:[#allocation5 + $0x4] sm:$0xf]
        %v224 = vld [vmem:[#allocation5 + $0x8] sm:$0xf]
        %v225 = vld [vmem:[#allocation5 + $0xc] sm:$0xf]
        %v226 = vld [vmem:[#allocation5 + $0x10] sm:$0xf]
        %v227 = vld [vmem:[#allocation5 + $0x14] sm:$0xf]
        %v228 = vld [vmem:[#allocation5 + $0x18] sm:$0xf]
        %v229 = vld [vmem:[#allocation5 + $0x1c] sm:$0xf]
        %v233 = vunpack.c.l.b16 %v219
        %v234 = vunpack.c.l.b16 %v220
        %v235 = vunpack.c.l.b16 %v221
        %v236 = vpack.c.b16 %v234, %v233
        %v237 = vpack.c.b16 %v235, %v235
        %v246 = vunpack.c.l.b16 %v222
        %v247 = vunpack.c.l.b16 %v223
        %v248 = vunpack.c.l.b16 %v224
        %v249 = vunpack.c.l.b16 %v225
        %v250 = vunpack.c.l.b16 %v226
        %v251 = vunpack.c.l.b16 %v227
        %v252 = vunpack.c.l.b16 %v228
        %v253 = vunpack.c.l.b16 %v229
        %v254 = vpack.c.b16 %v247, %v246
        %v255 = vpack.c.b16 %v249, %v248
        %v256 = vpack.c.b16 %v251, %v250
        %v257 = vpack.c.b16 %v253, %v252
        %vm262 = vcmask 523264
        %v264 = vsel %vm262, %v236, 0
        %v267 = vsel %vm262, %v237, 0
        %269 = vmatprep.subr.bf16.mxu0 0
        %270 = vmatpush1.bf16.msra.mxu0 %v254
        %271 = vmatprep.subr.bf16.mxu0 0
        %272 = vmatpush1.bf16.msra.mxu0 %v255
        %273 = vmatprep.subr.bf16.mxu0 0
        %274 = vmatpush1.bf16.msra.mxu0 %v256
        %275 = vmatprep.subr.bf16.mxu0 0
        %276 = vmatpush1.bf16.msra.mxu0 %v257
        %277 = vmatprep.subr.bf16.mxu0 0
        %278 = vmatpush1.bf16.msra.mxu0 0
        %279 = vmatprep.subr.bf16.mxu0 0
        %280 = vmatpush1.bf16.msra.mxu0 0
        %281 = vmatprep.subr.bf16.mxu0 0
        %282 = vmatpush1.bf16.msra.mxu0 0
        %283 = vmatprep.subr.bf16.mxu0 0
        %284 = vmatpush1.bf16.msra.mxu0 0
        %285 = vmatprep.subr.bf16.mxu0 0
        %286 = vmatpush1.bf16.msra.mxu0 0
        %287 = vmatprep.subr.bf16.mxu0 0
        %288 = vmatpush1.bf16.msra.mxu0 0
        %289 = vmatprep.subr.bf16.mxu0 0
        %290 = vmatpush1.bf16.msra.mxu0 0
        %291 = vmatprep.subr.bf16.mxu0 0
        %292 = vmatpush1.bf16.msra.mxu0 0
        %293 = vmatprep.subr.bf16.mxu0 0
        %294 = vmatpush1.bf16.msra.mxu0 0
        %295 = vmatprep.subr.bf16.mxu0 0
        %296 = vmatpush1.bf16.msra.mxu0 0
        %297 = vmatprep.subr.bf16.mxu0 0
        %298 = vmatpush1.bf16.msra.mxu0 0
        %299 = vmatprep.subr.bf16.mxu0 0
        %300 = vmatpush1.bf16.msra.mxu0 0
        %301 = vmatprep.mubr.bf16.mxu0 0
        %302 = vmatmul.mubr.bf16.gmra.mrb[0].mxu0 %v264
        %v303 = vpop.f32.mrb[0].mxu0
        %v304 = vadd.f32 0.0, %v303
        %v305 = vpop.f32.mrb[0].mxu0
        %v306 = vpop.f32.mrb[0].mxu0
        %v307 = vadd.f32 0.0, %v306
        %v308 = vpop.f32.mrb[0].mxu0
        %309 = vmatprep.mubr.bf16.mxu0 0
        %310 = vmatmul.mubr.bf16.gmra.mrb[0].mxu0 %v267
        %v311 = vpop.f32.mrb[0].mxu0
        %v312 = vadd.f32 0.0, %v311
        %v313 = vpop.f32.mrb[0].mxu0
        %v314 = vpop.f32.mrb[0].mxu0
        %v315 = vpop.f32.mrb[0].mxu0
        %316 = vdwg.mxu0
        %v317 = vld [vmem:[#allocation7] sm:$0xff]
        %v318 = vld [vmem:[#allocation7 + $0x8] sm:$0xff]
        %v319 = vld [vmem:[#allocation7 + $0x10] sm:$0xff]
        %v320 = vadd.f32 %v304, %v317
        %v321 = vadd.f32 %v307, %v318
        %v322 = vadd.f32 %v312, %v319
        %323 = vst [vmem:[%s217] sm:$0xff] %v320
        %324 = vst [vmem:[%s217 + $0x8] sm:$0xff] %v321
        %325 = vst [vmem:[%s217 + $0x10] sm:$0xff] %v322
        %s326 = sand.u32 %s97, 1
        %s327 = scalar_lea.sflag [#allocation4], %s326
        %s328 = sand.u32 %s97, 1
        %s329 = smul.addr %s328, 24
        %s330 = scalar_lea.vmem [#allocation8], %s329
        // Predicated region
        $region45: #{tpu_custom_call.1} parent=31 // pred_check
          %p331 = pneg %p107
        $region46: #{tpu_custom_call.1} parent=31 // pred_check_branch
          %333 = sbr.rel (%p331) target = $region48
        $region47: #{tpu_custom_call.1} parent=31 // pred_region
          %s335 = ssub.s32 384, 384
          %336 = vsyncadd %s327, %s335
          %s337 = smul.addr %s21, 3
          %s338 = smul.addr %s337, 128
          %s339 = scalar_lea.hbm %s3, %s338
          %s340 = sshll.u32 %s330, 4
          %s341 = int_to_ptr.vmem [resolvable:$true] %s340
          %346 = dma.vmem_to_hbm [thread:$0]  %s341, 384, %s339, %s327, 128, 128, 8
        $region48: #{tpu_custom_call.1} parent=31 // pred_fallthru
          _
      $region32: #{tpu_custom_call.1} parent=5 // pred_fallthru
        _
      %p347 = scmp.le.s32.totalorder 2, %s16
      // Predicated region
      $region49: #{tpu_custom_call.1} parent=5 // pred_check
        %p348 = pneg %p347
      $region50: #{tpu_custom_call.1} parent=5 // pred_check_branch
        %350 = sbr.rel (%p348) target = $region52
      $region51: #{tpu_custom_call.1} parent=5 // pred_region
        %s351 = ssub.s32 %s16, 2
        // Predicated region
        $region53: #{tpu_custom_call.1} parent=51 // pred_check
          %p352 = pneg %p113
        $region54: #{tpu_custom_call.1} parent=51 // pred_check_branch
          %354 = sbr.rel (%p352) target = $region56
        $region55: #{tpu_custom_call.1} parent=51 // pred_region
          %s355 = sand.u32 %s98, 1
          %s356 = scalar_lea.sflag [#allocation4], %s355
          %s357 = sand.u32 %s98, 1
          %s358 = smul.addr %s357, 24
          %s359 = scalar_lea.vmem [#allocation8], %s358
          %360 = dma.done %s356, 384
        $region56: #{tpu_custom_call.1} parent=51 // pred_fallthru
          _
      $region52: #{tpu_custom_call.1} parent=5 // pred_fallthru
        _
    $region6: #{tpu_custom_call.1} parent=1 // loop_footer
      %s20 = sadd.s32 1, %s16
    $region7: #{tpu_custom_call.1} parent=1 // loop_footer_branch
      %15 = sbr.rel target = $region3
    $region8: #{tpu_custom_call.1} parent=1 // loop_exit
      _
    %361 = vsyncpa [#allocation3], 1
    %s362 = scalar_lea.sflag [#allocation3], 1
    %363 = vsyncpa %s362, 1
    %364 = vsyncpa [#allocation6], 1
    %365 = vsyncpa [#allocation4], 1
    %s366 = scalar_lea.sflag [#allocation4], 1
    %367 = vsyncpa %s366, 1

</llo_original>
